<compile_context>
chip_gen: v5e
topology: v5e:2x2
jax: 0.10.0
libtpu: 0.0.40
codegen_flags: <defaults>
</compile_context>

<pallas_src>
import functools

import jax
import jax.numpy as jnp
from jax import lax
from jax.experimental import pallas as pl
from jax.experimental.pallas import tpu as pltpu


def _round_up(n, m):
    return ((n + m - 1) // m) * m


def _select_batch_tile(B, align):
    """Fixed (not divisor-searched) batch tile.

    - Big enough to amortize the ~0.35us/grid-step pipeline overhead.
    - Capped at TB_MAX=4096: the x tile is at most 4096*32*4B = 512 KiB
      (1 MiB double-buffered), far under any VMEM limit -> no vmem_limit_bytes.
    - For B >= 256, capped at ~B/2 so the 'parallel' grid axis has >= 2 steps
      and v7x's two TensorCores both get work.
    """
    TB_MAX = 4096
    if B >= 256:
        return min(TB_MAX, _round_up(pl.cdiv(B, 2), align))
    return _round_up(B, align)


def _mean_kernel_batch_major(x_ref, w_ref, b_ref, mean_ref, *, norm_pre):
    # x: [TB, Din], w: [Dout, Din] (PyTorch Linear layout). Contracting dim 1
    # of both operands == x @ W.T on the MXU, with no host-side transpose.
    mean = lax.dot_general(
        x_ref[...], w_ref[...],
        dimension_numbers=(((1,), (1,)), ((), ())),
        preferred_element_type=jnp.float32,
    ) + b_ref[...]
    if norm_pre:
        mean = jnp.tanh(mean)
    mean_ref[...] = mean.astype(mean_ref.dtype)


def _mean_kernel_feature_major(xT_ref, w_ref, b_ref, meanT_ref, *, norm_pre):
    # xT: [Din, TB], w: [Dout, Din] -> meanT: [Dout, TB].  The batch lives on
    # the 128-lane axis, so the x read and the mean store are lane-dense
    # (no 128-lane physical padding, no masked vst.msk partial stores) -- the
    # single biggest lever for this mem-bound head when the surrounding
    # network can consume/produce feature-major activations.
    meanT = lax.dot_general(
        w_ref[...], xT_ref[...],
        dimension_numbers=(((1,), (0,)), ((), ())),
        preferred_element_type=jnp.float32,
    ) + b_ref[...]
    if norm_pre:
        meanT = jnp.tanh(meanT)
    meanT_ref[...] = meanT.astype(meanT_ref.dtype)


def diag_gaussian_forward(x, w, b, logstd, min_std, norm_actions_pre_sampling,
                          *, feature_major=False, matmul_in_bf16=False,
                          jnp_fallback_below=0):
    """Returns (action_mean, std) of the diagonal-Gaussian policy head.

    Default (batch-major) layout:
        x:    [B, num_inputs],  action_mean: [B, num_outputs]
    feature_major=True (lane-dense; use when producer/consumer are feature-major):
        x:    [num_inputs, B],  action_mean: [num_outputs, B]

    w:      [num_outputs, num_inputs]  (PyTorch Linear weight layout, NOT transposed)
    b:      [num_outputs]
    logstd: [num_outputs]
    min_std: python scalar (compile-time hyperparameter)
    std:    [num_outputs] (Normal(loc, scale) broadcasting recovers [B, Dout] lazily)
    """
    norm_pre = bool(norm_actions_pre_sampling)
    Dout, Din = w.shape
    B = x.shape[1] if feature_major else x.shape[0]

    # std = max(min_std, exp(logstd)) is parameter-only (independent of x):
    # compute it once here instead of writing B identical rows from the kernel.
    std = jnp.maximum(jnp.float32(min_std), jnp.exp(logstd))

    # Tiny batches: the whole op is a few KB / a few hundred FLOPs, so the
    # custom-call launch overhead exceeds the kernel runtime.  Callers can opt
    # into a plain-jnp fallback (better still: fuse this head into the
    # upstream MLP's Pallas kernel so x never round-trips HBM).
    if B < jnp_fallback_below:
        if feature_major:
            mean = w @ x + b[:, None]
        else:
            mean = x @ w.T + b
        if norm_pre:
            mean = jnp.tanh(mean)
        return mean, std

    # Optional bf16 matmul operands (halves x/w HBM traffic); the MXU
    # accumulates in f32 and bias/tanh/store stay f32.
    in_dtype = jnp.bfloat16 if matmul_in_bf16 else x.dtype
    xk = x.astype(in_dtype)
    wk = w.astype(in_dtype)

    # Lane-dense feature-major tiles put the batch on the 128-lane axis, so
    # align TB to 128 there; batch-major only needs the 8-sublane alignment.
    align = 128 if feature_major else 8
    TB = _select_batch_tile(B, align)
    n_tiles = pl.cdiv(B, TB)
    B_pad = n_tiles * TB

    compiler_params = pltpu.CompilerParams(
        # Batch tiles are independent -> parallel (shards across TCs on v7x).
        dimension_semantics=("parallel",))

    if feature_major:
        if B_pad != B:
            # Zero-pad the tail tile; padded columns compute tanh(b) garbage
            # that is sliced off below (never read OOB, never returned).
            xk = jnp.pad(xk, ((0, 0), (0, B_pad - B)))
        b2 = b.reshape(Dout, 1).astype(jnp.float32)
        kernel = functools.partial(_mean_kernel_feature_major, norm_pre=norm_pre)
        meanT = pl.pallas_call(
            kernel,
            grid=(n_tiles,),
            in_specs=[
                pl.BlockSpec((Din, TB), lambda i: (0, i)),    # xT tile (pipelined)
                pl.BlockSpec((Dout, Din), lambda i: (0, 0)),  # weight, resident
                pl.BlockSpec((Dout, 1), lambda i: (0, 0)),    # bias, resident
            ],
            out_specs=pl.BlockSpec((Dout, TB), lambda i: (0, i)),
            out_shape=jax.ShapeDtypeStruct((Dout, B_pad), jnp.float32),
            compiler_params=compiler_params,
        )(xk, wk, b2)
        mean = meanT[:, :B] if B_pad != B else meanT
        return mean, std

    # Batch-major (module's native [B, Dout] contract).  NOTE: with Dout=8 /
    # Din=32 these tiles are lane-sparse; prefer feature_major=True (or fusing
    # this head upstream) when the surrounding layout allows it.
    if B_pad != B:
        xk = jnp.pad(xk, ((0, B_pad - B), (0, 0)))
    b2 = b.reshape(1, Dout).astype(jnp.float32)
    kernel = functools.partial(_mean_kernel_batch_major, norm_pre=norm_pre)
    mean = pl.pallas_call(
        kernel,
        grid=(n_tiles,),
        in_specs=[
            pl.BlockSpec((TB, Din), lambda i: (i, 0)),     # x tile (pipelined)
            pl.BlockSpec((Dout, Din), lambda i: (0, 0)),   # weight, resident
            pl.BlockSpec((1, Dout), lambda i: (0, 0)),     # bias, resident
        ],
        out_specs=pl.BlockSpec((TB, Dout), lambda i: (i, 0)),
        out_shape=jax.ShapeDtypeStruct((B_pad, Dout), jnp.float32),
        compiler_params=compiler_params,
    )(xk, wk, b2)
    if B_pad != B:
        mean = mean[:B]
    return mean, std


def init_normc(key, num_outputs, num_inputs, gain=1.0):
    """JAX port of init_normc_: normal(0,1) then normalize rows (dim=1)."""
    w = jax.random.normal(key, (num_outputs, num_inputs), jnp.float32)
    w = w * (gain / jnp.sqrt(jnp.sum(w * w, axis=1, keepdims=True)))
    return w


if __name__ == "__main__":
    # Module hyperparams (synthetic, deterministic, small).
    num_inputs = 32
    num_outputs = 8
    init_std = 0.5
    norm_actions_pre_sampling = True
    min_std = 1e-6

    key = jax.random.PRNGKey(0)
    kw, kx1, kx2 = jax.random.split(key, 3)

    # Parameters (as DiagGaussian.__init__ would build them).
    w = init_normc(kw, num_outputs, num_inputs, gain=1.0)        # fc_mean.weight
    b = jnp.zeros((num_outputs,), jnp.float32)                   # fc_mean.bias
    logstd = jnp.full((num_outputs,), jnp.log(init_std), jnp.float32)

    def ref_forward(xx):
        m = xx @ w.T + b
        if norm_actions_pre_sampling:
            m = jnp.tanh(m)
        s = jnp.maximum(jnp.float32(min_std), jnp.exp(logstd))
        return m, s

    # 1) Small batch, module-native [B, Din] layout.
    x_small = jax.random.normal(kx1, (8, num_inputs), jnp.float32)
    mean, std = diag_gaussian_forward(
        x_small, w, b, logstd, min_std, norm_actions_pre_sampling)
    jax.block_until_ready((mean, std))
    ref_mean, ref_std = ref_forward(x_small)
    assert mean.shape == (8, num_outputs)
    assert jnp.allclose(mean, ref_mean, atol=1e-5, rtol=1e-5)
    assert jnp.allclose(std, ref_std, atol=1e-6, rtol=1e-6)
    assert jnp.allclose(jnp.broadcast_to(std, mean.shape),
                        jnp.broadcast_to(ref_std, ref_mean.shape))

    # 2) Non-multiple batch -> exercises fixed-TB tiling, zero-padded tail,
    #    and a 2-step "parallel" grid (v7x two-TensorCore sharding).
    x_tail = jax.random.normal(kx2, (300, num_inputs), jnp.float32)
    mean_t, _ = diag_gaussian_forward(
        x_tail, w, b, logstd, min_std, norm_actions_pre_sampling)
    jax.block_until_ready(mean_t)
    ref_mean_t, _ = ref_forward(x_tail)
    assert mean_t.shape == (300, num_outputs)
    assert jnp.allclose(mean_t, ref_mean_t, atol=1e-5, rtol=1e-5)

    # 3) Lane-dense feature-major path ([Din, B] in, [Dout, B] out) -- for use
    #    when the producer/consumer already live in feature-major layout.
    mean_fm, _ = diag_gaussian_forward(
        x_small.T, w, b, logstd, min_std, norm_actions_pre_sampling,
        feature_major=True)
    jax.block_until_ready(mean_fm)
    assert mean_fm.shape == (num_outputs, 8)
    assert jnp.allclose(mean_fm.T, ref_mean, atol=1e-5, rtol=1e-5)

    # 4) bf16 matmul operands (f32 accumulate / bias / tanh / store).
    mean_bf, _ = diag_gaussian_forward(
        x_small, w, b, logstd, min_std, norm_actions_pre_sampling,
        matmul_in_bf16=True)
    jax.block_until_ready(mean_bf)
    assert jnp.allclose(mean_bf, ref_mean, atol=3e-2, rtol=3e-2)

    # TODO(synk): the torch module returns a Normal distribution object; the
    # kernel returns its (mean, std) parameters, which is the full forward math.
    print("KERNEL_OK")
</pallas_src>

<mosaic_0001>
module attributes {stable_mosaic.version = 11 : i64} {
  func.func @_mean_kernel_batch_major(%arg0: i32, %arg1: memref<8x32xf32, #tpu.memory_space<vmem>>, %arg2: memref<8x32xf32, #tpu.memory_space<vmem>>, %arg3: memref<1x8xf32, #tpu.memory_space<vmem>>, %arg4: memref<8x8xf32, #tpu.memory_space<vmem>>) attributes {dimension_semantics = [#tpu.dimension_semantics<parallel>], iteration_bounds = array<i64: 1>, scalar_prefetch = 0 : i64, scratch_operands = 0 : i64, tpu.core_type = #tpu.core_type<tc>, window_params = [{transform_indices = @transform_0, window_bounds = array<i64: 8, 32>}, {pipeline_mode = #tpu.pipeline_mode<synchronous>, transform_indices = @transform_1, window_bounds = array<i64: 8, 32>}, {pipeline_mode = #tpu.pipeline_mode<synchronous>, transform_indices = @transform_2, window_bounds = array<i64: 1, 8>}, {transform_indices = @transform_3, window_bounds = array<i64: 8, 8>}]} {
    %c0 = arith.constant 0 : index
    %c0_0 = arith.constant 0 : index
    %0 = vector.load %arg1[%c0, %c0_0] : memref<8x32xf32, #tpu.memory_space<vmem>>, vector<8x32xf32>
    %c0_1 = arith.constant 0 : index
    %c0_2 = arith.constant 0 : index
    %1 = vector.load %arg2[%c0_1, %c0_2] : memref<8x32xf32, #tpu.memory_space<vmem>>, vector<8x32xf32>
    %cst = arith.constant dense<0.000000e+00> : vector<8x8xf32>
    %2 = tpu.matmul %0, %1, %cst {dimension_numbers = #tpu.dot_dimension_numbers<[1], [1], [0], [0], [0, 0, 1, 0], [], []>} : vector<8x32xf32>, vector<8x32xf32>, vector<8x8xf32> -> vector<8x8xf32>
    %c0_3 = arith.constant 0 : index
    %c0_4 = arith.constant 0 : index
    %3 = vector.load %arg3[%c0_3, %c0_4] : memref<1x8xf32, #tpu.memory_space<vmem>>, vector<1x8xf32>
    %4 = vector.broadcast %3 : vector<1x8xf32> to vector<8x8xf32>
    %5 = arith.addf %2, %4 : vector<8x8xf32>
    %6 = math.tanh %5 : vector<8x8xf32>
    %c0_5 = arith.constant 0 : index
    %c0_6 = arith.constant 0 : index
    %7 = vector.load %arg4[%c0_5, %c0_6] : memref<8x8xf32, #tpu.memory_space<vmem>>, vector<8x8xf32>
    tpu.vector_store %arg4[%c0_5, %c0_6], %6 {strides = array<i32>} : memref<8x8xf32, #tpu.memory_space<vmem>>, vector<8x8xf32>,
    return
  }
  func.func @transform_0(%arg0: i32) -> (i32, i32) {
    %c0_i32 = arith.constant 0 : i32
    %c0_i32_0 = arith.constant 0 : i32
    return %arg0, %c0_i32 : i32, i32
  }
  func.func @transform_1(%arg0: i32) -> (i32, i32) {
    %c0_i32 = arith.constant 0 : i32
    %c0_i32_0 = arith.constant 0 : i32
    %c0_i32_1 = arith.constant 0 : i32
    return %c0_i32, %c0_i32_0 : i32, i32
  }
  func.func @transform_2(%arg0: i32) -> (i32, i32) {
    %c0_i32 = arith.constant 0 : i32
    %c0_i32_0 = arith.constant 0 : i32
    %c0_i32_1 = arith.constant 0 : i32
    return %c0_i32, %c0_i32_0 : i32, i32
  }
  func.func @transform_3(%arg0: i32) -> (i32, i32) {
    %c0_i32 = arith.constant 0 : i32
    %c0_i32_0 = arith.constant 0 : i32
    return %arg0, %c0_i32 : i32, i32
  }
}

</mosaic_0001>

<llo_original>
// kernel: tpu_custom_call.1
$region0: #{tpu_custom_call.1}
  #allocation0 [shape = 'u32[]', space=smem, size = 0x4, offset = 0x4, fixed_abs, tag = 'smem constant byte address 0x4 - core index']
  #allocation1 [shape = 'u32[72,128]{1,0:T(1,128)}', space=vmem, size = 0x9000, scoped, tag = 'internal scratch']
  %s0 = inlined_call_operand.hbm [shape: f32[8,32], index: 0, kind: input, shape index: {}]
  %s1 = inlined_call_operand.hbm [shape: f32[8,32], index: 1, kind: input, shape index: {}]
  %s2 = inlined_call_operand.vmem [shape: f32[1,8], index: 2, kind: input, shape index: {}]
  %s3 = inlined_call_operand.hbm [shape: f32[8,8], index: 3, kind: output, shape index: {}]
  %s4 = sld [smem:[#allocation0]]
  $region30: #{tpu_custom_call.1} parent=0
    _
  %s6 = ssub.s32 1, %s4
  %s7 = scalar_select 0, %s6, %s4
  $region1: #{tpu_custom_call.1} parent=0
    #allocation2 [shape = 'u8[4096]{0}', space=vmem, size = 0x1000, scoped, tag = 'input window, operand 0, single buffered']
    #allocation3 [shape = 's32[1]{0}', space=sflag, size = 0x4, scoped, tag = 'scoped memory for tpu_custom_call.1']
    #allocation4 [shape = 's32[1]{0}', space=sflag, size = 0x4, scoped, tag = 'scoped memory for tpu_custom_call.1']
    #allocation5 [shape = 'u8[4096]{0}', space=vmem, size = 0x1000, scoped, tag = 'input window, operand 1, single buffered']
    #allocation6 [shape = 's32[1]{0}', space=sflag, size = 0x4, scoped, tag = 'scoped memory for tpu_custom_call.1']
    #allocation7 [shape = 'u8[4096]{0}', space=vmem, size = 0x1000, scoped, tag = 'output window, operand 0, single buffered']
    %8 = vsyncpa [#allocation3], 0
    %9 = vsyncpa [#allocation6], 0
    %10 = vsyncpa [#allocation4], 0
    // Predicated region
    $region2: #{tpu_custom_call.1} parent=1 // pred_check
      _
    $region3: #{tpu_custom_call.1} parent=1 // pred_check_branch
      %12 = sbr.rel (0) target = $region5
    $region4: #{tpu_custom_call.1} parent=1 // pred_region
      %14 = vsyncadd [#allocation3], 0
      %s16 = sshll.u32 %s0, 4
      %s17 = int_to_ptr.hbm [resolvable:$true] %s16
      %s18 = sshll.u32 [#allocation2], 4
      %s19 = int_to_ptr.vmem [resolvable:$true] %s18
      %21 = dma.hbm_to_vmem [thread:$0]  %s17, 128, %s19, [#allocation3]
    $region5: #{tpu_custom_call.1} parent=1 // pred_fallthru
      _
    // Predicated region
    $region6: #{tpu_custom_call.1} parent=1 // pred_check
      _
    $region7: #{tpu_custom_call.1} parent=1 // pred_check_branch
      %23 = sbr.rel (0) target = $region9
    $region8: #{tpu_custom_call.1} parent=1 // pred_region
      %25 = vsyncadd [#allocation6], 0
      %s27 = sshll.u32 %s1, 4
      %s28 = int_to_ptr.hbm [resolvable:$true] %s27
      %s29 = sshll.u32 [#allocation5], 4
      %s30 = int_to_ptr.vmem [resolvable:$true] %s29
      %32 = dma.hbm_to_vmem [thread:$0]  %s28, 128, %s30, [#allocation6]
    $region9: #{tpu_custom_call.1} parent=1 // pred_fallthru
      _
    // Predicated region
    $region10: #{tpu_custom_call.1} parent=1 // pred_check
      _
    $region11: #{tpu_custom_call.1} parent=1 // pred_check_branch
      %34 = sbr.rel (0) target = $region13
    $region12: #{tpu_custom_call.1} parent=1 // pred_region
      _
    $region13: #{tpu_custom_call.1} parent=1 // pred_fallthru
      _
    // Predicated region
    $region14: #{tpu_custom_call.1} parent=1 // pred_check
      _
    $region15: #{tpu_custom_call.1} parent=1 // pred_check_branch
      %36 = sbr.rel (0) target = $region17
    $region16: #{tpu_custom_call.1} parent=1 // pred_region
      %38 = dma.done [#allocation3], 128
    $region17: #{tpu_custom_call.1} parent=1 // pred_fallthru
      _
    // Predicated region
    $region18: #{tpu_custom_call.1} parent=1 // pred_check
      _
    $region19: #{tpu_custom_call.1} parent=1 // pred_check_branch
      %40 = sbr.rel (0) target = $region21
    $region20: #{tpu_custom_call.1} parent=1 // pred_region
      %42 = dma.done [#allocation6], 128
    $region21: #{tpu_custom_call.1} parent=1 // pred_fallthru
      _
    %v43 = vld [vmem:[#allocation2] sm:$0xff]
    %v44 = vld [vmem:[#allocation5] sm:$0xff]
    %v45 = vld [vmem:[%s2] sm:$0x1]
    %v47 = vperm.slane %v45, 0
    %vm49 = vcmask 261120
    %v51 = vsel %vm49, %v43, 0
    %v54 = vsel %vm49, %v44, 0
    %56 = vmatpush.xpose.msra.mxu0 0.0
    %57 = vmatpush.xpose.msra.mxu0 0.0
    %58 = vmatpush.xpose.msra.mxu0 0.0
    %59 = vmatpush.xpose.msra.mxu0 0.0
    %60 = vmatpush.xpose.msra.mxu0 0.0
    %61 = vmatpush.xpose.msra.mxu0 0.0
    %62 = vmatpush.xpose.msra.mxu0 0.0
    %63 = vmatpush.xpose.msra.mxu0 0.0
    %64 = vmatpush.xpose.msra.mxu0 0.0
    %65 = vmatpush.xpose.msra.mxu0 0.0
    %66 = vmatpush.xpose.msra.mxu0 0.0
    %67 = vmatpush.xpose.msra.mxu0 0.0
    %68 = vmatpush.xpose.msra.mxu0 0.0
    %69 = vmatpush.xpose.msra.mxu0 0.0
    %70 = vmatpush.xpose.msra.mxu0 0.0
    %71 = vmatpush.xpose.msra.mxu0 %v54
    %72 = vmatmul.f32.gmra.mxu0 %v51
    %v73 = vpop.f32.mrf.mxu0
    %v74 = vadd.f32 %v47, %v73
    %75 = vdwg.mxu0
    %v76 = vtanh.pop %v74
    %vm77 = vcmask 64512
    %78 = vst.msk [vmem:[#allocation7] sm:$0xff] %vm77, %v76
    // Predicated region
    $region22: #{tpu_custom_call.1} parent=1 // pred_check
      _
    $region23: #{tpu_custom_call.1} parent=1 // pred_check_branch
      %80 = sbr.rel (0) target = $region25
    $region24: #{tpu_custom_call.1} parent=1 // pred_region
      %82 = vsyncadd [#allocation4], 0
      %s84 = sshll.u32 [#allocation7], 4
      %s85 = int_to_ptr.vmem [resolvable:$true] %s84
      %s86 = sshll.u32 %s3, 4
      %s87 = int_to_ptr.hbm [resolvable:$true] %s86
      %89 = dma.vmem_to_hbm [thread:$0]  %s85, 128, %s87, [#allocation4]
    $region25: #{tpu_custom_call.1} parent=1 // pred_fallthru
      _
    // Predicated region
    $region26: #{tpu_custom_call.1} parent=1 // pred_check
      _
    $region27: #{tpu_custom_call.1} parent=1 // pred_check_branch
      %91 = sbr.rel (0) target = $region29
    $region28: #{tpu_custom_call.1} parent=1 // pred_region
      %93 = dma.done [#allocation4], 128
    $region29: #{tpu_custom_call.1} parent=1 // pred_fallthru
      _
    %94 = vsyncpa [#allocation3], 1
    %95 = vsyncpa [#allocation6], 1
    %96 = vsyncpa [#allocation4], 1

</llo_original>
